<compile_context>
chip_gen: v7x
topology: tpu7x:2x2x1
jax: 0.10.0
libtpu: 0.0.40
codegen_flags: <defaults>
</compile_context>

<pallas_src>
import jax
import jax.numpy as jnp
from jax.experimental import pallas as pl
from jax.experimental.pallas import tpu as pltpu

LANE = 128      # TPU vreg lane width
SUBLANE = 8     # TPU vreg sublane count (f32)


def _round_up(n, m):
    return (n + m - 1) // m * m


def sentiment_mlp_kernel(x_ref, w1_ref, b1_ref, w2_ref, b2_ref, o_ref):
    # x: [TB, F], w1: [F, HP], b1: [1, HP], w2: [HP, C], b2: [1, C], o: [TB, C]
    w_dtype = w1_ref.dtype
    x = x_ref[...].astype(w_dtype)

    # linear1 + ReLU (MXU dot with f32 accumulation; bias/ReLU in f32)
    h = jnp.dot(x, w1_ref[...], preferred_element_type=jnp.float32) + b1_ref[...]
    h = jnp.maximum(h, 0.0)

    # linear2 -> logits [TB, C] (padded hidden rows of w2 are zero, h pad is 0)
    logits = (jnp.dot(h.astype(w_dtype), w2_ref[...],
                      preferred_element_type=jnp.float32) + b2_ref[...])

    # numerically-stable log-softmax along the class axis; single narrow store.
    m = jnp.max(logits, axis=1, keepdims=True)
    lse = jnp.log(jnp.sum(jnp.exp(logits - m), axis=1, keepdims=True))
    o_ref[...] = (logits - m - lse).astype(o_ref.dtype)


def prepare_params(w1, b1, w2, b2, param_dtype=jnp.bfloat16, hidden_pad=LANE):
    """One-time parameter prep (hoisted out of the per-call path).

    torch layout in :  w1: [H, F], b1: [H], w2: [C, H], b2: [C]
    kernel layout out: w1_p: [F, HP], b1_r: [1, HP], w2_p: [HP, C], b2_r: [1, C]
    """
    w1 = jnp.asarray(w1, jnp.float32)
    w2 = jnp.asarray(w2, jnp.float32)
    H, _F = w1.shape
    C = w2.shape[0]
    HP = max(hidden_pad, _round_up(H, LANE))

    # Zero-pad hidden dim to a full 128-lane vreg: lane-dense h, clean MXU
    # K-dim for the second matmul; exact because ReLU(0)=0 and padded w2 rows
    # are zero.  Weights in param_dtype (bf16 by default), biases stay f32
    # (added post-accumulation).
    w1_p = jnp.pad(w1.T, ((0, 0), (0, HP - H))).astype(param_dtype)            # [F, HP]
    b1_r = jnp.pad(jnp.asarray(b1, jnp.float32).reshape(1, H),
                   ((0, 0), (0, HP - H)))                                      # [1, HP]
    w2_p = jnp.pad(w2.T, ((0, HP - H), (0, 0))).astype(param_dtype)            # [HP, C]
    b2_r = jnp.asarray(b2, jnp.float32).reshape(1, C)                          # [1, C]
    return (w1_p, b1_r, w2_p, b2_r)


def sentiment_forward(x, params, *, tb_max=4096):
    """x: [B, F]; params from prepare_params. Returns [B, C] f32 log-probs."""
    w1_p, b1_r, w2_p, b2_r = params
    B, F = x.shape
    HP = w1_p.shape[1]
    C = w2_p.shape[1]

    # Batch tile: multiple of the 8-row sublane granule; aim for >= 2 grid
    # steps whenever B allows it (so v7x's second TensorCore has work), capped
    # at tb_max to amortize per-grid-step overhead while keeping the
    # double-buffered x/out tiles tiny on every generation.
    bp8 = _round_up(B, SUBLANE)
    tb_half = _round_up(pl.cdiv(bp8, 2), SUBLANE)
    TB = max(SUBLANE, min(tb_max, tb_half))
    grid = (pl.cdiv(B, TB),)

    out = pl.pallas_call(
        sentiment_mlp_kernel,
        out_shape=jax.ShapeDtypeStruct((B, C), jnp.float32),
        grid=grid,
        in_specs=[
            pl.BlockSpec((TB, F), lambda i: (i, 0)),    # x: pipelined batch tiles
            pl.BlockSpec((F, HP), lambda i: (0, 0)),    # w1: VMEM-resident
            pl.BlockSpec((1, HP), lambda i: (0, 0)),    # b1: VMEM-resident
            pl.BlockSpec((HP, C), lambda i: (0, 0)),    # w2: VMEM-resident
            pl.BlockSpec((1, C), lambda i: (0, 0)),     # b2: VMEM-resident
        ],
        out_specs=pl.BlockSpec((TB, C), lambda i: (i, 0)),   # narrow (C-wide) store
        compiler_params=pltpu.CompilerParams(
            dimension_semantics=("parallel",),          # megacore split on v7x
            vmem_limit_bytes=32 * 1024 * 1024,          # explicit, safe on v5e..v7x
        ),
    )(x, w1_p, b1_r, w2_p, b2_r)

    # No wrapper-side slice: out is already exactly [B, C].
    return out


def _init_linear(key, out_dim, in_dim):
    # Deterministic init mimicking nn.Linear's uniform(-1/sqrt(in), 1/sqrt(in)).
    kw, kb = jax.random.split(key)
    bound = 1.0 / jnp.sqrt(jnp.asarray(in_dim, jnp.float32))
    w = jax.random.uniform(kw, (out_dim, in_dim), jnp.float32, -bound, bound)
    b = jax.random.uniform(kb, (out_dim,), jnp.float32, -bound, bound)
    return w, b


if __name__ == "__main__":
    NUM_FEATURES = 32
    NUM_CLASSES = 4
    HIDDEN = 10
    BATCH = 8

    key = jax.random.PRNGKey(0)
    kx, k1, k2 = jax.random.split(key, 3)

    x = jax.random.normal(kx, (BATCH, NUM_FEATURES), jnp.float32)
    w1, b1 = _init_linear(k1, HIDDEN, NUM_FEATURES)
    w2, b2 = _init_linear(k2, NUM_CLASSES, HIDDEN)

    # Pure-JAX reference (same math as the PyTorch module).
    h_ref = jnp.maximum(x @ w1.T + b1, 0.0)
    ref = jax.nn.log_softmax(h_ref @ w2.T + b2, axis=1)

    # f32 parameter path: bit-for-bit semantics of the original module.
    params_f32 = prepare_params(w1, b1, w2, b2, param_dtype=jnp.float32)
    out_f32 = jax.block_until_ready(sentiment_forward(x, params_f32))
    assert out_f32.shape == (BATCH, NUM_CLASSES)
    assert jnp.allclose(out_f32, ref, atol=1e-5), "f32 mismatch vs reference"

    # bf16 parameter path (default): MXU-native, half the weight/input-feed bytes.
    params_bf16 = prepare_params(w1, b1, w2, b2)
    out_bf16 = jax.block_until_ready(sentiment_forward(x, params_bf16))
    assert out_bf16.shape == (BATCH, NUM_CLASSES)
    assert jnp.allclose(out_bf16, ref, atol=1e-1), "bf16 mismatch vs reference"

    print("KERNEL_OK")
</pallas_src>

<mosaic_0001>
module attributes {stable_mosaic.version = 11 : i64} {
  func.func @sentiment_mlp_kernel(%arg0: i32, %arg1: memref<8x32xf32, #tpu.memory_space<vmem>>, %arg2: memref<32x128xf32, #tpu.memory_space<vmem>>, %arg3: memref<1x128xf32, #tpu.memory_space<vmem>>, %arg4: memref<128x4xf32, #tpu.memory_space<vmem>>, %arg5: memref<1x4xf32, #tpu.memory_space<vmem>>, %arg6: memref<8x4xf32, #tpu.memory_space<vmem>>) attributes {dimension_semantics = [#tpu.dimension_semantics<parallel>], iteration_bounds = array<i64: 1>, scalar_prefetch = 0 : i64, scratch_operands = 0 : i64, tpu.core_type = #tpu.core_type<tc>, window_params = [{transform_indices = @transform_0, window_bounds = array<i64: 8, 32>}, {pipeline_mode = #tpu.pipeline_mode<synchronous>, transform_indices = @transform_1, window_bounds = array<i64: 32, 128>}, {pipeline_mode = #tpu.pipeline_mode<synchronous>, transform_indices = @transform_2, window_bounds = array<i64: 1, 128>}, {pipeline_mode = #tpu.pipeline_mode<synchronous>, transform_indices = @transform_3, window_bounds = array<i64: 128, 4>}, {pipeline_mode = #tpu.pipeline_mode<synchronous>, transform_indices = @transform_4, window_bounds = array<i64: 1, 4>}, {transform_indices = @transform_5, window_bounds = array<i64: 8, 4>}]} {
    %c0 = arith.constant 0 : index
    %c0_0 = arith.constant 0 : index
    %0 = vector.load %arg1[%c0, %c0_0] : memref<8x32xf32, #tpu.memory_space<vmem>>, vector<8x32xf32>
    %c0_1 = arith.constant 0 : index
    %c0_2 = arith.constant 0 : index
    %1 = vector.load %arg2[%c0_1, %c0_2] : memref<32x128xf32, #tpu.memory_space<vmem>>, vector<32x128xf32>
    %cst = arith.constant dense<0.000000e+00> : vector<8x128xf32>
    %2 = tpu.matmul %0, %1, %cst {dimension_numbers = #tpu.dot_dimension_numbers<[1], [0], [0], [1], [0, 0, 1, 1], [], []>} : vector<8x32xf32>, vector<32x128xf32>, vector<8x128xf32> -> vector<8x128xf32>
    %c0_3 = arith.constant 0 : index
    %c0_4 = arith.constant 0 : index
    %3 = vector.load %arg3[%c0_3, %c0_4] : memref<1x128xf32, #tpu.memory_space<vmem>>, vector<1x128xf32>
    %4 = vector.broadcast %3 : vector<1x128xf32> to vector<8x128xf32>
    %5 = arith.addf %2, %4 : vector<8x128xf32>
    %cst_5 = arith.constant 0.000000e+00 : f32
    %6 = vector.broadcast %cst_5 : f32 to vector<8x128xf32>
    %7 = arith.maximumf %5, %6 : vector<8x128xf32>
    %c0_6 = arith.constant 0 : index
    %c0_7 = arith.constant 0 : index
    %8 = vector.load %arg4[%c0_6, %c0_7] : memref<128x4xf32, #tpu.memory_space<vmem>>, vector<128x4xf32>
    %cst_8 = arith.constant dense<0.000000e+00> : vector<8x4xf32>
    %9 = tpu.matmul %7, %8, %cst_8 {dimension_numbers = #tpu.dot_dimension_numbers<[1], [0], [0], [1], [0, 0, 1, 1], [], []>} : vector<8x128xf32>, vector<128x4xf32>, vector<8x4xf32> -> vector<8x4xf32>
    %c0_9 = arith.constant 0 : index
    %c0_10 = arith.constant 0 : index
    %10 = vector.load %arg5[%c0_9, %c0_10] : memref<1x4xf32, #tpu.memory_space<vmem>>, vector<1x4xf32>
    %11 = vector.broadcast %10 : vector<1x4xf32> to vector<8x4xf32>
    %12 = arith.addf %9, %11 : vector<8x4xf32>
    %cst_11 = arith.constant dense<0xFF800000> : vector<8xf32>
    %13 = vector.multi_reduction <maximumf>, %12, %cst_11 [1] : vector<8x4xf32> to vector<8xf32>
    %14 = vector.shape_cast %13 : vector<8xf32> to vector<8x1xf32>
    %15 = vector.broadcast %14 : vector<8x1xf32> to vector<8x4xf32>
    %16 = arith.subf %12, %15 : vector<8x4xf32>
    %17 = math.exp %16 : vector<8x4xf32>
    %cst_12 = arith.constant dense<0.000000e+00> : vector<8xf32>
    %18 = vector.multi_reduction <add>, %17, %cst_12 [1] : vector<8x4xf32> to vector<8xf32>
    %19 = vector.shape_cast %18 : vector<8xf32> to vector<8x1xf32>
    %20 = math.log %19 : vector<8x1xf32>
    %21 = vector.broadcast %14 : vector<8x1xf32> to vector<8x4xf32>
    %22 = arith.subf %12, %21 : vector<8x4xf32>
    %23 = vector.broadcast %20 : vector<8x1xf32> to vector<8x4xf32>
    %24 = arith.subf %22, %23 : vector<8x4xf32>
    %c0_13 = arith.constant 0 : index
    %c0_14 = arith.constant 0 : index
    %25 = vector.load %arg6[%c0_13, %c0_14] : memref<8x4xf32, #tpu.memory_space<vmem>>, vector<8x4xf32>
    tpu.vector_store %arg6[%c0_13, %c0_14], %24 {strides = array<i32>} : memref<8x4xf32, #tpu.memory_space<vmem>>, vector<8x4xf32>,
    return
  }
  func.func @transform_0(%arg0: i32) -> (i32, i32) {
    %c0_i32 = arith.constant 0 : i32
    %c0_i32_0 = arith.constant 0 : i32
    return %arg0, %c0_i32 : i32, i32
  }
  func.func @transform_1(%arg0: i32) -> (i32, i32) {
    %c0_i32 = arith.constant 0 : i32
    %c0_i32_0 = arith.constant 0 : i32
    %c0_i32_1 = arith.constant 0 : i32
    return %c0_i32, %c0_i32_0 : i32, i32
  }
  func.func @transform_2(%arg0: i32) -> (i32, i32) {
    %c0_i32 = arith.constant 0 : i32
    %c0_i32_0 = arith.constant 0 : i32
    %c0_i32_1 = arith.constant 0 : i32
    return %c0_i32, %c0_i32_0 : i32, i32
  }
  func.func @transform_3(%arg0: i32) -> (i32, i32) {
    %c0_i32 = arith.constant 0 : i32
    %c0_i32_0 = arith.constant 0 : i32
    %c0_i32_1 = arith.constant 0 : i32
    return %c0_i32, %c0_i32_0 : i32, i32
  }
  func.func @transform_4(%arg0: i32) -> (i32, i32) {
    %c0_i32 = arith.constant 0 : i32
    %c0_i32_0 = arith.constant 0 : i32
    %c0_i32_1 = arith.constant 0 : i32
    return %c0_i32, %c0_i32_0 : i32, i32
  }
  func.func @transform_5(%arg0: i32) -> (i32, i32) {
    %c0_i32 = arith.constant 0 : i32
    %c0_i32_0 = arith.constant 0 : i32
    return %arg0, %c0_i32 : i32, i32
  }
}

</mosaic_0001>

<llo_original>
// kernel: tpu_custom_call.1
$region0: #{tpu_custom_call.1}
  #allocation0 [shape = 'u32[]', space=smem, size = 0x4, offset = 0x4, fixed_abs, tag = 'smem constant byte address 0x4 - core index']
  #allocation1 [shape = 'u32[144,128]{1,0:T(1,128)}', space=vmem, size = 0x12000, scoped, tag = 'internal scratch']
  %s0 = inlined_call_operand.vmem [shape: f32[8,32], index: 0, kind: input, shape index: {}]
  %s1 = inlined_call_operand.vmem [shape: f32[32,128], index: 1, kind: input, shape index: {}]
  %s2 = inlined_call_operand.vmem [shape: f32[1,128], index: 2, kind: input, shape index: {}]
  %s3 = inlined_call_operand.vmem [shape: f32[128,4], index: 3, kind: input, shape index: {}]
  %s4 = inlined_call_operand.vmem [shape: f32[1,4], index: 4, kind: input, shape index: {}]
  %s5 = inlined_call_operand.vmem [shape: f32[8,4], index: 5, kind: output, shape index: {}]
  %s6 = sld [smem:[#allocation0]]
  $region30: #{tpu_custom_call.1} parent=0
    _
  %s8 = ssub.s32 1, %s6
  %s9 = scalar_select 0, %s8, %s6
  // Predicated region
  $region2: #{tpu_custom_call.1} parent=0 // pred_check
    _
  $region3: #{tpu_custom_call.1} parent=0 // pred_check_branch
    %11 = sbr.rel (0) target = $region5
  $region4: #{tpu_custom_call.1} parent=0 // pred_region
    _
  $region5: #{tpu_custom_call.1} parent=0 // pred_fallthru
    _
  // Predicated region
  $region6: #{tpu_custom_call.1} parent=0 // pred_check
    _
  $region7: #{tpu_custom_call.1} parent=0 // pred_check_branch
    %13 = sbr.rel (0) target = $region9
  $region8: #{tpu_custom_call.1} parent=0 // pred_region
    _
  $region9: #{tpu_custom_call.1} parent=0 // pred_fallthru
    _
  // Predicated region
  $region10: #{tpu_custom_call.1} parent=0 // pred_check
    _
  $region11: #{tpu_custom_call.1} parent=0 // pred_check_branch
    %15 = sbr.rel (0) target = $region13
  $region12: #{tpu_custom_call.1} parent=0 // pred_region
    _
  $region13: #{tpu_custom_call.1} parent=0 // pred_fallthru
    _
  // Predicated region
  $region14: #{tpu_custom_call.1} parent=0 // pred_check
    _
  $region15: #{tpu_custom_call.1} parent=0 // pred_check_branch
    %17 = sbr.rel (0) target = $region17
  $region16: #{tpu_custom_call.1} parent=0 // pred_region
    _
  $region17: #{tpu_custom_call.1} parent=0 // pred_fallthru
    _
  // Predicated region
  $region18: #{tpu_custom_call.1} parent=0 // pred_check
    _
  $region19: #{tpu_custom_call.1} parent=0 // pred_check_branch
    %19 = sbr.rel (0) target = $region21
  $region20: #{tpu_custom_call.1} parent=0 // pred_region
    _
  $region21: #{tpu_custom_call.1} parent=0 // pred_fallthru
    _
  %v20 = vld [vmem:[%s0] sm:$0xff]
  %v21 = vld [vmem:[%s1] sm:$0xff]
  %v22 = vld [vmem:[%s1 + $0x8] sm:$0xff]
  %v23 = vld [vmem:[%s1 + $0x10] sm:$0xff]
  %v24 = vld [vmem:[%s1 + $0x18] sm:$0xff]
  %v25 = vld [vmem:[%s2] sm:$0x1]
  %v27 = vlaneseq
  %v28 = vshrl.u32 %v27, 7
  %v29 = vsub.s32 0, %v28
  %v30 = vrot.slane %v25, %v29
  %vm32 = vcmask 261120
  %v34 = vsel %vm32, %v20, 0
  %36 = vmatprep.subr.mxu0 0.0
  %37 = vmatpush1.msra.mxu0 %v21
  %38 = vmatprep.subr.mxu0 0.0
  %39 = vmatpush1.msra.mxu0 %v22
  %40 = vmatprep.subr.mxu0 0.0
  %41 = vmatpush1.msra.mxu0 %v23
  %42 = vmatprep.subr.mxu0 0.0
  %43 = vmatpush1.msra.mxu0 %v24
  %44 = vmatprep.subr.mxu0 0.0
  %45 = vmatpush1.msra.mxu0 0.0
  %46 = vmatprep.subr.mxu0 0.0
  %47 = vmatpush1.msra.mxu0 0.0
  %48 = vmatprep.subr.mxu0 0.0
  %49 = vmatpush1.msra.mxu0 0.0
  %50 = vmatprep.subr.mxu0 0.0
  %51 = vmatpush1.msra.mxu0 0.0
  %52 = vmatprep.subr.mxu0 0.0
  %53 = vmatpush1.msra.mxu0 0.0
  %54 = vmatprep.subr.mxu0 0.0
  %55 = vmatpush1.msra.mxu0 0.0
  %56 = vmatprep.subr.mxu0 0.0
  %57 = vmatpush1.msra.mxu0 0.0
  %58 = vmatprep.subr.mxu0 0.0
  %59 = vmatpush1.msra.mxu0 0.0
  %60 = vmatprep.subr.mxu0 0.0
  %61 = vmatpush1.msra.mxu0 0.0
  %62 = vmatprep.subr.mxu0 0.0
  %63 = vmatpush1.msra.mxu0 0.0
  %64 = vmatprep.subr.mxu0 0.0
  %65 = vmatpush1.msra.mxu0 0.0
  %66 = vmatprep.subr.mxu0 0.0
  %67 = vmatpush1.msra.mxu0 0.0
  %68 = vmatprep.subr.mxu0 0.0
  %69 = vmatpush1.msra.mxu0 0.0
  %70 = vmatprep.subr.mxu0 0.0
  %71 = vmatpush1.msra.mxu0 0.0
  %72 = vmatprep.subr.mxu0 0.0
  %73 = vmatpush1.msra.mxu0 0.0
  %74 = vmatprep.subr.mxu0 0.0
  %75 = vmatpush1.msra.mxu0 0.0
  %76 = vmatprep.subr.mxu0 0.0
  %77 = vmatpush1.msra.mxu0 0.0
  %78 = vmatprep.subr.mxu0 0.0
  %79 = vmatpush1.msra.mxu0 0.0
  %80 = vmatprep.subr.mxu0 0.0
  %81 = vmatpush1.msra.mxu0 0.0
  %82 = vmatprep.subr.mxu0 0.0
  %83 = vmatpush1.msra.mxu0 0.0
  %84 = vmatprep.subr.mxu0 0.0
  %85 = vmatpush1.msra.mxu0 0.0
  %86 = vmatprep.subr.mxu0 0.0
  %87 = vmatpush1.msra.mxu0 0.0
  %88 = vmatprep.subr.mxu0 0.0
  %89 = vmatpush1.msra.mxu0 0.0
  %90 = vmatprep.subr.mxu0 0.0
  %91 = vmatpush1.msra.mxu0 0.0
  %92 = vmatprep.subr.mxu0 0.0
  %93 = vmatpush1.msra.mxu0 0.0
  %94 = vmatprep.subr.mxu0 0.0
  %95 = vmatpush1.msra.mxu0 0.0
  %96 = vmatprep.subr.mxu0 0.0
  %97 = vmatpush1.msra.mxu0 0.0
  %98 = vmatprep.subr.mxu0 0.0
  %99 = vmatpush1.msra.mxu0 0.0
  %100 = vmatprep.mubr.f32.mxu0 0.0
  %101 = vmatmul.mubr.f32.gmra.mrb[0].mxu0 %v34
  %v102 = vpop.f32.mrb[0].mxu0
  %v103 = vadd.f32 %v30, %v102
  %v104 = vpop.f32.mrb[0].mxu0
  %105 = vdwg.mxu0
  %v106 = vmax.f32 %v103, 0.0
  %v107 = vld [vmem:[%s3] sm:$0xff]
  %v108 = vld [vmem:[%s3 + $0x8] sm:$0xff]
  %v109 = vld [vmem:[%s3 + $0x10] sm:$0xff]
  %v110 = vld [vmem:[%s3 + $0x18] sm:$0xff]
  %v111 = vld [vmem:[%s3 + $0x20] sm:$0xff]
  %v112 = vld [vmem:[%s3 + $0x28] sm:$0xff]
  %v113 = vld [vmem:[%s3 + $0x30] sm:$0xff]
  %v114 = vld [vmem:[%s3 + $0x38] sm:$0xff]
  %v115 = vld [vmem:[%s3 + $0x40] sm:$0xff]
  %v116 = vld [vmem:[%s3 + $0x48] sm:$0xff]
  %v117 = vld [vmem:[%s3 + $0x50] sm:$0xff]
  %v118 = vld [vmem:[%s3 + $0x58] sm:$0xff]
  %v119 = vld [vmem:[%s3 + $0x60] sm:$0xff]
  %v120 = vld [vmem:[%s3 + $0x68] sm:$0xff]
  %v121 = vld [vmem:[%s3 + $0x70] sm:$0xff]
  %v122 = vld [vmem:[%s3 + $0x78] sm:$0xff]
  %v123 = vld [vmem:[%s4] sm:$0x1]
  %v125 = vlaneseq
  %v126 = vshrl.u32 %v125, 7
  %v127 = vsub.s32 0, %v126
  %v128 = vrot.slane %v123, %v127
  %130 = vmatprep.subr.mxu0 0.0
  %131 = vmatpush1.msra.mxu0 %v107
  %132 = vmatprep.subr.mxu0 0.0
  %133 = vmatpush1.msra.mxu0 %v108
  %134 = vmatprep.subr.mxu0 0.0
  %135 = vmatpush1.msra.mxu0 %v109
  %136 = vmatprep.subr.mxu0 0.0
  %137 = vmatpush1.msra.mxu0 %v110
  %138 = vmatprep.subr.mxu0 0.0
  %139 = vmatpush1.msra.mxu0 %v111
  %140 = vmatprep.subr.mxu0 0.0
  %141 = vmatpush1.msra.mxu0 %v112
  %142 = vmatprep.subr.mxu0 0.0
  %143 = vmatpush1.msra.mxu0 %v113
  %144 = vmatprep.subr.mxu0 0.0
  %145 = vmatpush1.msra.mxu0 %v114
  %146 = vmatprep.subr.mxu0 0.0
  %147 = vmatpush1.msra.mxu0 %v115
  %148 = vmatprep.subr.mxu0 0.0
  %149 = vmatpush1.msra.mxu0 %v116
  %150 = vmatprep.subr.mxu0 0.0
  %151 = vmatpush1.msra.mxu0 %v117
  %152 = vmatprep.subr.mxu0 0.0
  %153 = vmatpush1.msra.mxu0 %v118
  %154 = vmatprep.subr.mxu0 0.0
  %155 = vmatpush1.msra.mxu0 %v119
  %156 = vmatprep.subr.mxu0 0.0
  %157 = vmatpush1.msra.mxu0 %v120
  %158 = vmatprep.subr.mxu0 0.0
  %159 = vmatpush1.msra.mxu0 %v121
  %160 = vmatprep.subr.mxu0 0.0
  %161 = vmatpush1.msra.mxu0 %v122
  %162 = vmatprep.subr.mxu0 0.0
  %163 = vmatpush1.msra.mxu0 0.0
  %164 = vmatprep.subr.mxu0 0.0
  %165 = vmatpush1.msra.mxu0 0.0
  %166 = vmatprep.subr.mxu0 0.0
  %167 = vmatpush1.msra.mxu0 0.0
  %168 = vmatprep.subr.mxu0 0.0
  %169 = vmatpush1.msra.mxu0 0.0
  %170 = vmatprep.subr.mxu0 0.0
  %171 = vmatpush1.msra.mxu0 0.0
  %172 = vmatprep.subr.mxu0 0.0
  %173 = vmatpush1.msra.mxu0 0.0
  %174 = vmatprep.subr.mxu0 0.0
  %175 = vmatpush1.msra.mxu0 0.0
  %176 = vmatprep.subr.mxu0 0.0
  %177 = vmatpush1.msra.mxu0 0.0
  %178 = vmatprep.subr.mxu0 0.0
  %179 = vmatpush1.msra.mxu0 0.0
  %180 = vmatprep.subr.mxu0 0.0
  %181 = vmatpush1.msra.mxu0 0.0
  %182 = vmatprep.subr.mxu0 0.0
  %183 = vmatpush1.msra.mxu0 0.0
  %184 = vmatprep.subr.mxu0 0.0
  %185 = vmatpush1.msra.mxu0 0.0
  %186 = vmatprep.subr.mxu0 0.0
  %187 = vmatpush1.msra.mxu0 0.0
  %188 = vmatprep.subr.mxu0 0.0
  %189 = vmatpush1.msra.mxu0 0.0
  %190 = vmatprep.subr.mxu0 0.0
  %191 = vmatpush1.msra.mxu0 0.0
  %192 = vmatprep.subr.mxu0 0.0
  %193 = vmatpush1.msra.mxu0 0.0
  %194 = vmatprep.mubr.f32.mxu0 0.0
  %195 = vmatmul.mubr.f32.gmra.mrb[0].mxu0 %v106
  %v196 = vpop.f32.mrb[0].mxu0
  %v197 = vadd.f32 %v128, %v196
  %v198 = vpop.f32.mrb[0].mxu0
  %199 = vdwg.mxu0
  %vm200 = vcmask 31744
  %v201 = vsel %vm200, %v197, -inf
  %202 = vmax.xlane.f32.xlu0 %v201
  %v203 = vpop.xlane.xlu0 %202
  %v204 = vsub.f32 %v197, %v203
  %v205 = vmul.f32 %v204, 1.442695
  %v206 = vpow.pop %v205
  %v207 = vsel %vm200, %v206, 0.0
  %208 = vadd.xlane.f32.xlu0 %v207
  %v209 = vpop.xlane.xlu0 %208
  %v210 = vlog2.pop %v209
  %v211 = vmul.f32 %v210, 0.6931472
  %v212 = vsub.f32 %v204, %v211
  %213 = vst.msk [vmem:[%s5] sm:$0xff] %vm200, %v212
  // Predicated region
  $region22: #{tpu_custom_call.1} parent=0 // pred_check
    _
  $region23: #{tpu_custom_call.1} parent=0 // pred_check_branch
    %215 = sbr.rel (0) target = $region25
  $region24: #{tpu_custom_call.1} parent=0 // pred_region
    _
  $region25: #{tpu_custom_call.1} parent=0 // pred_fallthru
    _
  // Predicated region
  $region26: #{tpu_custom_call.1} parent=0 // pred_check
    _
  $region27: #{tpu_custom_call.1} parent=0 // pred_check_branch
    %217 = sbr.rel (0) target = $region29
  $region28: #{tpu_custom_call.1} parent=0 // pred_region
    _
  $region29: #{tpu_custom_call.1} parent=0 // pred_fallthru
    _

</llo_original>
